<compile_context>
chip_gen: v7x
topology: tpu7x:2x2x1
jax: 0.10.0
libtpu: 0.0.40
codegen_flags: <defaults>
</compile_context>

<pallas_src>
import jax
import jax.numpy as jnp
from jax import lax
from jax.experimental import pallas as pl
from jax.experimental.pallas import tpu as pltpu


def _lrtop_kernel(x_ref, w_ref, b_ref, o_ref):
    """x_ref: (TB, F) native dtype -- one contiguous HBM slab per grid step.
       w_ref: (C, F)  f32 -- VMEM-resident across all grid steps.
       b_ref: (C, 1)  f32 -- VMEM-resident.
       o_ref: (C, TB) f32 -- lane-dense softmax probabilities (class-major)."""
    x = x_ref[...].astype(jnp.float32)                 # cast on the VPU, not in HBM

    # (C, F) contracted with (TB, F) over F (transposed-RHS matmul, the same
    # dimension-number pattern flash attention uses for q @ k^T).  Result is
    # (C, TB): batch on the 128-lane axis, so everything below is lane-dense.
    logits = lax.dot_general(
        w_ref[...], x,
        dimension_numbers=(((1,), (1,)), ((), ())),
        preferred_element_type=jnp.float32)            # (C, TB)
    logits = logits + b_ref[...]                       # (C, 1) lane-broadcast

    # Numerically-stable softmax over the class (sublane) axis.  exp(.) <= 1,
    # so the old two-class inf*0 -> NaN failure mode cannot occur.
    m = jnp.max(logits, axis=0, keepdims=True)
    e = jnp.exp(logits - m)
    o_ref[...] = e / jnp.sum(e, axis=0, keepdims=True)


def lrtop_forward_concat(x, weight, bias, *, max_block_b=16384, class_major=False):
    """x:      (B, 2*num_clients) already-concatenated activations (any float dtype,
               streamed to the kernel in its native dtype -- no f32 upcast pass).
       weight: (C, 2*num_clients)  (PyTorch nn.Linear layout)
       bias:   (C,)
       Returns softmax(x @ weight.T + bias, axis=1): (B, C), or (C, B) if class_major."""
    B, F = x.shape
    C = weight.shape[0]

    # --- lane-tile selection -------------------------------------------------
    # Multiple of 128; aim for >= 8 grid steps on large batches (>= 4 per
    # TensorCore on v7x); cap by VMEM: the (TB, F) input block lane-pads F->128
    # and the (C, TB) output block sublane-pads C->8, both double-buffered.
    lane_pad = max(128, ((F + 127) // 128) * 128)
    c_pad = max(8, ((C + 7) // 8) * 8)
    bytes_per_row = 2 * lane_pad * x.dtype.itemsize + 2 * c_pad * 4
    vmem_budget = 24 * 1024 * 1024                       # leave headroom under 32 MiB
    tb_vmem_cap = max(128, (vmem_budget // bytes_per_row) // 128 * 128)
    tb_split = ((max(B, 1) + 7) // 8 + 127) // 128 * 128  # ~8 steps for large B
    TB = max(128, min(max_block_b, tb_vmem_cap, tb_split))

    num_steps = (B + TB - 1) // TB
    Bp = num_steps * TB          # padded extent of the *output only*; x is NOT padded

    w = weight.astype(jnp.float32)                       # (C, F) tiny, VMEM-resident
    b2 = bias.reshape(C, 1).astype(jnp.float32)          # (C, 1)

    out_t = pl.pallas_call(
        _lrtop_kernel,
        out_shape=jax.ShapeDtypeStruct((C, Bp), jnp.float32),
        grid=(num_steps,),
        in_specs=[
            pl.BlockSpec((TB, F), lambda i: (i, 0)),     # contiguous, double-buffered
            pl.BlockSpec((C, F), lambda i: (0, 0)),      # resident params
            pl.BlockSpec((C, 1), lambda i: (0, 0)),
        ],
        out_specs=pl.BlockSpec((C, TB), lambda i: (0, i)),   # lane-dense stores
        compiler_params=pltpu.CompilerParams(
            dimension_semantics=("parallel",),               # megacore on v7x
            vmem_limit_bytes=32 * 1024 * 1024),              # v5e default is 16 MiB
    )(x, w, b2)

    if class_major:
        return out_t[:, :B]      # (C, B): skips the final transpose pass entirely
    return out_t[:, :B].T        # (B, C): matches the nn.Module output layout


def lrtop_forward(inputs, weight, bias, **kwargs):
    """inputs: list of (B, 2) arrays (len == num_clients).
       The module concatenates them along dim=1; a single jnp.concatenate in the
       natural (B, F) layout (no transpose, no dtype upcast) is the only XLA pass
       over x left outside the kernel."""
    # TODO(synk): if the caller can hand over the already-concatenated (B, F)
    # activations (or keep them fused upstream), call lrtop_forward_concat
    # directly and this remaining pass disappears too.
    x = jnp.concatenate(inputs, axis=1)
    return lrtop_forward_concat(x, weight, bias, **kwargs)


if __name__ == "__main__":
    num_clients = 4
    num_classes = 2
    batch = 8
    in_features = 2 * num_clients

    key = jax.random.PRNGKey(0)
    k_w, k_b, *k_inputs = jax.random.split(key, 2 + num_clients)

    # Deterministic parameter init mimicking nn.Linear default (+/- 1/sqrt(fan_in)).
    bound = 1.0 / jnp.sqrt(jnp.float32(in_features))
    weight = jax.random.uniform(
        k_w, (num_classes, in_features), jnp.float32, -bound, bound)
    bias = jax.random.uniform(
        k_b, (num_classes,), jnp.float32, -bound, bound)

    # Each client contributes a (batch, 2) tensor (2 * num_clients features total).
    inputs = [jax.random.normal(k, (batch, 2), jnp.float32) for k in k_inputs]

    out = lrtop_forward(inputs, weight, bias)
    out = jax.block_until_ready(out)

    # Reference check in plain JAX.
    x_ref = jnp.concatenate(inputs, axis=1)
    logits_ref = x_ref @ weight.T + bias
    ref = jax.nn.softmax(logits_ref, axis=1)
    assert out.shape == (batch, num_classes)
    assert jnp.allclose(out, ref, atol=1e-5, rtol=1e-5), float(jnp.max(jnp.abs(out - ref)))

    print("KERNEL_OK")
</pallas_src>

<mosaic_0001>
module attributes {stable_mosaic.version = 11 : i64} {
  func.func @_lrtop_kernel(%arg0: i32, %arg1: memref<128x8xf32, #tpu.memory_space<vmem>>, %arg2: memref<2x8xf32, #tpu.memory_space<vmem>>, %arg3: memref<2x1xf32, #tpu.memory_space<vmem>>, %arg4: memref<2x128xf32, #tpu.memory_space<vmem>>) attributes {dimension_semantics = [#tpu.dimension_semantics<parallel>], iteration_bounds = array<i64: 1>, scalar_prefetch = 0 : i64, scratch_operands = 0 : i64, tpu.core_type = #tpu.core_type<tc>, window_params = [{transform_indices = @transform_0, window_bounds = array<i64: 128, 8>}, {pipeline_mode = #tpu.pipeline_mode<synchronous>, transform_indices = @transform_1, window_bounds = array<i64: 2, 8>}, {pipeline_mode = #tpu.pipeline_mode<synchronous>, transform_indices = @transform_2, window_bounds = array<i64: 2, 1>}, {transform_indices = @transform_3, window_bounds = array<i64: 2, 128>}]} {
    %c0 = arith.constant 0 : index
    %c0_0 = arith.constant 0 : index
    %0 = vector.load %arg1[%c0, %c0_0] : memref<128x8xf32, #tpu.memory_space<vmem>>, vector<128x8xf32>
    %c0_1 = arith.constant 0 : index
    %c0_2 = arith.constant 0 : index
    %1 = vector.load %arg2[%c0_1, %c0_2] : memref<2x8xf32, #tpu.memory_space<vmem>>, vector<2x8xf32>
    %cst = arith.constant dense<0.000000e+00> : vector<2x128xf32>
    %2 = tpu.matmul %1, %0, %cst {dimension_numbers = #tpu.dot_dimension_numbers<[1], [1], [0], [0], [0, 0, 1, 0], [], []>} : vector<2x8xf32>, vector<128x8xf32>, vector<2x128xf32> -> vector<2x128xf32>
    %c0_3 = arith.constant 0 : index
    %c0_4 = arith.constant 0 : index
    %3 = vector.load %arg3[%c0_3, %c0_4] : memref<2x1xf32, #tpu.memory_space<vmem>>, vector<2x1xf32>
    %4 = vector.broadcast %3 : vector<2x1xf32> to vector<2x128xf32>
    %5 = arith.addf %2, %4 : vector<2x128xf32>
    %cst_5 = arith.constant dense<0xFF800000> : vector<128xf32>
    %6 = vector.multi_reduction <maximumf>, %5, %cst_5 [0] : vector<2x128xf32> to vector<128xf32>
    %7 = vector.shape_cast %6 : vector<128xf32> to vector<1x128xf32>
    %8 = vector.broadcast %7 : vector<1x128xf32> to vector<2x128xf32>
    %9 = arith.subf %5, %8 : vector<2x128xf32>
    %10 = math.exp %9 : vector<2x128xf32>
    %cst_6 = arith.constant dense<0.000000e+00> : vector<128xf32>
    %11 = vector.multi_reduction <add>, %10, %cst_6 [0] : vector<2x128xf32> to vector<128xf32>
    %12 = vector.shape_cast %11 : vector<128xf32> to vector<1x128xf32>
    %13 = vector.broadcast %12 : vector<1x128xf32> to vector<2x128xf32>
    %14 = arith.divf %10, %13 : vector<2x128xf32>
    %c0_7 = arith.constant 0 : index
    %c0_8 = arith.constant 0 : index
    %15 = vector.load %arg4[%c0_7, %c0_8] : memref<2x128xf32, #tpu.memory_space<vmem>>, vector<2x128xf32>
    tpu.vector_store %arg4[%c0_7, %c0_8], %14 {strides = array<i32>} : memref<2x128xf32, #tpu.memory_space<vmem>>, vector<2x128xf32>,
    return
  }
  func.func @transform_0(%arg0: i32) -> (i32, i32) {
    %c0_i32 = arith.constant 0 : i32
    %c0_i32_0 = arith.constant 0 : i32
    return %arg0, %c0_i32 : i32, i32
  }
  func.func @transform_1(%arg0: i32) -> (i32, i32) {
    %c0_i32 = arith.constant 0 : i32
    %c0_i32_0 = arith.constant 0 : i32
    %c0_i32_1 = arith.constant 0 : i32
    return %c0_i32, %c0_i32_0 : i32, i32
  }
  func.func @transform_2(%arg0: i32) -> (i32, i32) {
    %c0_i32 = arith.constant 0 : i32
    %c0_i32_0 = arith.constant 0 : i32
    %c0_i32_1 = arith.constant 0 : i32
    return %c0_i32, %c0_i32_0 : i32, i32
  }
  func.func @transform_3(%arg0: i32) -> (i32, i32) {
    %c0_i32 = arith.constant 0 : i32
    %c0_i32_0 = arith.constant 0 : i32
    return %c0_i32, %arg0 : i32, i32
  }
}

</mosaic_0001>

<llo_original>
// kernel: tpu_custom_call.1
$region0: #{tpu_custom_call.1}
  #allocation0 [shape = 'u32[]', space=smem, size = 0x4, offset = 0x4, fixed_abs, tag = 'smem constant byte address 0x4 - core index']
  #allocation1 [shape = 'u32[144,128]{1,0:T(1,128)}', space=vmem, size = 0x12000, scoped, tag = 'internal scratch']
  %s0 = inlined_call_operand.hbm [shape: f32[8,8], index: 0, kind: input, shape index: {}]
  %s1 = inlined_call_operand.vmem [shape: f32[2,8], index: 1, kind: input, shape index: {}]
  %s2 = inlined_call_operand.vmem [shape: f32[2,1], index: 2, kind: input, shape index: {}]
  %s3 = inlined_call_operand.hbm [shape: f32[2,128], index: 3, kind: output, shape index: {}]
  %s4 = sld [smem:[#allocation0]]
  $region26: #{tpu_custom_call.1} parent=0
    _
  %s6 = ssub.s32 1, %s4
  %s7 = scalar_select 0, %s6, %s4
  $region1: #{tpu_custom_call.1} parent=0
    #allocation2 [shape = 'u8[65536]{0}', space=vmem, size = 0x10000, scoped, tag = 'input window, operand 0, single buffered']
    #allocation3 [shape = 's32[1]{0}', space=sflag, size = 0x4, scoped, tag = 'scoped memory for tpu_custom_call.1']
    #allocation4 [shape = 's32[1]{0}', space=sflag, size = 0x4, scoped, tag = 'scoped memory for tpu_custom_call.1']
    #allocation5 [shape = 'u8[1024]{0}', space=vmem, size = 0x400, scoped, tag = 'output window, operand 0, single buffered']
    %8 = vsyncpa [#allocation3], 0
    %9 = vsyncpa [#allocation4], 0
    // Predicated region
    $region2: #{tpu_custom_call.1} parent=1 // pred_check
      _
    $region3: #{tpu_custom_call.1} parent=1 // pred_check_branch
      %11 = sbr.rel (0) target = $region5
    $region4: #{tpu_custom_call.1} parent=1 // pred_region
      %s13 = ssub.s32 2048, 128
      %14 = vsyncadd [#allocation3], %s13
      %s15 = sshll.u32 [#allocation2], 4
      %s16 = int_to_ptr.vmem [resolvable:$true] %s15
      %21 = dma.hbm_to_vmem [thread:$0]  %s0, 128, %s16, [#allocation3], 128, 128, 8
    $region5: #{tpu_custom_call.1} parent=1 // pred_fallthru
      _
    // Predicated region
    $region6: #{tpu_custom_call.1} parent=1 // pred_check
      _
    $region7: #{tpu_custom_call.1} parent=1 // pred_check_branch
      %23 = sbr.rel (0) target = $region9
    $region8: #{tpu_custom_call.1} parent=1 // pred_region
      _
    $region9: #{tpu_custom_call.1} parent=1 // pred_fallthru
      _
    // Predicated region
    $region10: #{tpu_custom_call.1} parent=1 // pred_check
      _
    $region11: #{tpu_custom_call.1} parent=1 // pred_check_branch
      %25 = sbr.rel (0) target = $region13
    $region12: #{tpu_custom_call.1} parent=1 // pred_region
      _
    $region13: #{tpu_custom_call.1} parent=1 // pred_fallthru
      _
    // Predicated region
    $region14: #{tpu_custom_call.1} parent=1 // pred_check
      _
    $region15: #{tpu_custom_call.1} parent=1 // pred_check_branch
      %27 = sbr.rel (0) target = $region17
    $region16: #{tpu_custom_call.1} parent=1 // pred_region
      %28 = dma.done [#allocation3], 2048
    $region17: #{tpu_custom_call.1} parent=1 // pred_fallthru
      _
    %v29 = vld [vmem:[#allocation2] sm:$0xff]
    %v30 = vld [vmem:[#allocation2 + $0x8] sm:$0xff]
    %v31 = vld [vmem:[#allocation2 + $0x10] sm:$0xff]
    %v32 = vld [vmem:[#allocation2 + $0x18] sm:$0xff]
    %v33 = vld [vmem:[#allocation2 + $0x20] sm:$0xff]
    %v34 = vld [vmem:[#allocation2 + $0x28] sm:$0xff]
    %v35 = vld [vmem:[#allocation2 + $0x30] sm:$0xff]
    %v36 = vld [vmem:[#allocation2 + $0x38] sm:$0xff]
    %v37 = vld [vmem:[#allocation2 + $0x40] sm:$0xff]
    %v38 = vld [vmem:[#allocation2 + $0x48] sm:$0xff]
    %v39 = vld [vmem:[#allocation2 + $0x50] sm:$0xff]
    %v40 = vld [vmem:[#allocation2 + $0x58] sm:$0xff]
    %v41 = vld [vmem:[#allocation2 + $0x60] sm:$0xff]
    %v42 = vld [vmem:[#allocation2 + $0x68] sm:$0xff]
    %v43 = vld [vmem:[#allocation2 + $0x70] sm:$0xff]
    %v44 = vld [vmem:[#allocation2 + $0x78] sm:$0xff]
    %v45 = vld [vmem:[%s1] sm:$0x3]
    %v46 = vld [vmem:[%s2] sm:$0x3]
    %48 = vset.pattern.permute.xlu0 0
    %49 = vperm.xlu0 %48, %v46
    %v50 = vpop.permute.xlu0 %49
    %vm52 = vcmask 64512
    %v54 = vsel %vm52, %v45, 0
    %v57 = vsel %vm52, %v29, 0
    %v60 = vsel %vm52, %v30, 0
    %v63 = vsel %vm52, %v31, 0
    %v66 = vsel %vm52, %v32, 0
    %v69 = vsel %vm52, %v33, 0
    %v72 = vsel %vm52, %v34, 0
    %v75 = vsel %vm52, %v35, 0
    %v78 = vsel %vm52, %v36, 0
    %v81 = vsel %vm52, %v37, 0
    %v84 = vsel %vm52, %v38, 0
    %v87 = vsel %vm52, %v39, 0
    %v90 = vsel %vm52, %v40, 0
    %v93 = vsel %vm52, %v41, 0
    %v96 = vsel %vm52, %v42, 0
    %v99 = vsel %vm52, %v43, 0
    %v102 = vsel %vm52, %v44, 0
    %104 = vmatprep.subr.mxu0 0.0
    %105 = vmatpush1.xpose.msra.mxu0 %v57
    %106 = vmatprep.subr.mxu0 0.0
    %107 = vmatpush1.xpose.msra.mxu0 %v60
    %108 = vmatprep.subr.mxu0 0.0
    %109 = vmatpush1.xpose.msra.mxu0 %v63
    %110 = vmatprep.subr.mxu0 0.0
    %111 = vmatpush1.xpose.msra.mxu0 %v66
    %112 = vmatprep.subr.mxu0 0.0
    %113 = vmatpush1.xpose.msra.mxu0 %v69
    %114 = vmatprep.subr.mxu0 0.0
    %115 = vmatpush1.xpose.msra.mxu0 %v72
    %116 = vmatprep.subr.mxu0 0.0
    %117 = vmatpush1.xpose.msra.mxu0 %v75
    %118 = vmatprep.subr.mxu0 0.0
    %119 = vmatpush1.xpose.msra.mxu0 %v78
    %120 = vmatprep.subr.mxu0 0.0
    %121 = vmatpush1.xpose.msra.mxu0 %v81
    %122 = vmatprep.subr.mxu0 0.0
    %123 = vmatpush1.xpose.msra.mxu0 %v84
    %124 = vmatprep.subr.mxu0 0.0
    %125 = vmatpush1.xpose.msra.mxu0 %v87
    %126 = vmatprep.subr.mxu0 0.0
    %127 = vmatpush1.xpose.msra.mxu0 %v90
    %128 = vmatprep.subr.mxu0 0.0
    %129 = vmatpush1.xpose.msra.mxu0 %v93
    %130 = vmatprep.subr.mxu0 0.0
    %131 = vmatpush1.xpose.msra.mxu0 %v96
    %132 = vmatprep.subr.mxu0 0.0
    %133 = vmatpush1.xpose.msra.mxu0 %v99
    %134 = vmatprep.subr.mxu0 0.0
    %135 = vmatpush1.xpose.msra.mxu0 %v102
    %136 = vmatprep.subr.mxu0 0.0
    %137 = vmatpush1.xpose.msra.mxu0 0.0
    %138 = vmatprep.subr.mxu0 0.0
    %139 = vmatpush1.xpose.msra.mxu0 0.0
    %140 = vmatprep.subr.mxu0 0.0
    %141 = vmatpush1.xpose.msra.mxu0 0.0
    %142 = vmatprep.subr.mxu0 0.0
    %143 = vmatpush1.xpose.msra.mxu0 0.0
    %144 = vmatprep.subr.mxu0 0.0
    %145 = vmatpush1.xpose.msra.mxu0 0.0
    %146 = vmatprep.subr.mxu0 0.0
    %147 = vmatpush1.xpose.msra.mxu0 0.0
    %148 = vmatprep.subr.mxu0 0.0
    %149 = vmatpush1.xpose.msra.mxu0 0.0
    %150 = vmatprep.subr.mxu0 0.0
    %151 = vmatpush1.xpose.msra.mxu0 0.0
    %152 = vmatprep.subr.mxu0 0.0
    %153 = vmatpush1.xpose.msra.mxu0 0.0
    %154 = vmatprep.subr.mxu0 0.0
    %155 = vmatpush1.xpose.msra.mxu0 0.0
    %156 = vmatprep.subr.mxu0 0.0
    %157 = vmatpush1.xpose.msra.mxu0 0.0
    %158 = vmatprep.subr.mxu0 0.0
    %159 = vmatpush1.xpose.msra.mxu0 0.0
    %160 = vmatprep.subr.mxu0 0.0
    %161 = vmatpush1.xpose.msra.mxu0 0.0
    %162 = vmatprep.subr.mxu0 0.0
    %163 = vmatpush1.xpose.msra.mxu0 0.0
    %164 = vmatprep.subr.mxu0 0.0
    %165 = vmatpush1.xpose.msra.mxu0 0.0
    %166 = vmatprep.subr.mxu0 0.0
    %167 = vmatpush1.xpose.msra.mxu0 0.0
    %168 = vmatprep.mubr.f32.mxu0 0.0
    %169 = vmatmul.mubr.f32.gmra.mrb[0].mxu0 %v54
    %v170 = vpop.f32.mrb[0].mxu0
    %v171 = vadd.f32 %v50, %v170
    %v172 = vpop.f32.mrb[0].mxu0
    %173 = vdwg.mxu0
    %vm174 = vcmask 1041408
    %v175 = vsel %vm174, %v171, -inf
    %v176 = vrot.slane %v175, 4
    %v177 = vmax.f32 %v175, %v176
    %v178 = vrot.slane %v177, 2
    %v179 = vmax.f32 %v177, %v178
    %v180 = vrot.slane %v179, 1
    %v181 = vmax.f32 %v179, %v180
    %v182 = vsub.f32 %v171, %v181
    %v183 = vmul.f32 %v182, 1.442695
    %v184 = vpow.pop %v183
    %v185 = vsel %vm174, %v184, 0.0
    %v186 = vrot.slane %v185, 4
    %v187 = vadd.f32 %v185, %v186
    %v188 = vrot.slane %v187, 2
    %v189 = vadd.f32 %v187, %v188
    %v190 = vrot.slane %v189, 1
    %v191 = vadd.f32 %v189, %v190
    %v192 = vrcp.pop %v191
    %v193 = vmul.f32 %v184, %v192
    %194 = vst [vmem:[#allocation5] sm:$0x3] %v193
    // Predicated region
    $region18: #{tpu_custom_call.1} parent=1 // pred_check
      _
    $region19: #{tpu_custom_call.1} parent=1 // pred_check_branch
      %196 = sbr.rel (0) target = $region21
    $region20: #{tpu_custom_call.1} parent=1 // pred_region
      %s198 = ssub.s32 32, 32
      %199 = vsyncadd [#allocation4], %s198
      %s201 = sshll.u32 [#allocation5], 4
      %s202 = int_to_ptr.vmem [resolvable:$true] %s201
      %204 = dma.vmem_to_hbm [thread:$0]  %s202, 32, %s3, [#allocation4]
    $region21: #{tpu_custom_call.1} parent=1 // pred_fallthru
      _
    // Predicated region
    $region22: #{tpu_custom_call.1} parent=1 // pred_check
      _
    $region23: #{tpu_custom_call.1} parent=1 // pred_check_branch
      %206 = sbr.rel (0) target = $region25
    $region24: #{tpu_custom_call.1} parent=1 // pred_region
      %207 = dma.done [#allocation4], 32
    $region25: #{tpu_custom_call.1} parent=1 // pred_fallthru
      _
    %208 = vsyncpa [#allocation3], 1
    %209 = vsyncpa [#allocation4], 1

</llo_original>
